<compile_context>
chip_gen: v5e
topology: v5e:2x2
jax: 0.10.0
libtpu: 0.0.40
codegen_flags: <defaults>
</compile_context>

<pallas_src>
import functools
import math

import jax
import jax.numpy as jnp
from jax.experimental import pallas as pl
from jax.experimental.pallas import tpu as pltpu


def _rup(x, m):
    return ((x + m - 1) // m) * m


def _pick_m(M):
    """Row (sublane) tiling: multiples of 16 (bf16 packing)."""
    Mp16 = _rup(M, 16)
    if Mp16 <= 512:
        return Mp16, Mp16
    for t in (512, 256, 128, 64, 32, 16):
        cand = _rup(M, t)
        if cand <= Mp16 * 1.1:
            return cand, t
    return Mp16, 16


def _pick_n(N):
    """Column (lane) tiling: multiples of 128; prefer wide tiles for the MXU."""
    base = _rup(N, 128)
    for t in (512, 384, 256):
        cand = _rup(N, t)
        if cand <= base * 1.25:
            return cand, t
    return base, 128


def _pick_k(K, max_tk=1536):
    """K tiling: pad to 128; single K step if it fits, else a big exact divisor."""
    Kp = _rup(K, 128)
    if Kp <= max_tk:
        return Kp, Kp
    for m in range(max_tk // 128, 0, -1):
        t = m * 128
        if Kp % t == 0:
            return Kp, t
    return Kp, 128


# ----------------------------------------------------------------------------
# Pallas kernels
# ----------------------------------------------------------------------------
def _gemm_kernel(*refs, relu, has_res, nk):
    """bf16 (tm,tk)@(tk,tn), f32 accumulation, fused +bias (+residual) (+ReLU).

    nk == 1: single K step, no scratch accumulator (most layers).
    nk  > 1: accumulate into a resident f32 VMEM scratch, epilogue on last K.
    Output is written in bf16.
    """
    if nk > 1:
        refs, acc_ref = refs[:-1], refs[-1]
    else:
        acc_ref = None
    if has_res:
        a_ref, b_ref, c_ref, r_ref, o_ref = refs
    else:
        a_ref, b_ref, c_ref, o_ref = refs
        r_ref = None

    def _finish(acc):
        y = acc + c_ref[...]
        if has_res:
            y = y + r_ref[...].astype(jnp.float32)
        if relu:
            y = jnp.maximum(y, 0.0)
        o_ref[...] = y.astype(o_ref.dtype)

    if nk == 1:
        _finish(jnp.dot(a_ref[...], b_ref[...],
                        preferred_element_type=jnp.float32))
    else:
        k = pl.program_id(2)

        @pl.when(k == 0)
        def _():
            acc_ref[...] = jnp.zeros_like(acc_ref)

        acc_ref[...] += jnp.dot(a_ref[...], b_ref[...],
                                preferred_element_type=jnp.float32)

        @pl.when(k == nk - 1)
        def _():
            _finish(acc_ref[...])


def matmul_bias_act(a, b, bias, *, relu, residual=None):
    """(M,K)@(K,N) on the MXU in bf16, f32 accumulation, bf16 output."""
    M, K = a.shape
    K2, N = b.shape
    assert K == K2

    Mp, tm = _pick_m(M)
    Np, tn = _pick_n(N)
    Kp, tk = _pick_k(K)
    nk = Kp // tk
    gm, gn = Mp // tm, Np // tn
    # v7x has 2 TensorCores sharded over the parallel axes: avoid a (1,1,*) grid.
    if gm == 1 and gn == 1:
        if tm % 32 == 0:
            tm //= 2
            gm = 2
        elif tn % 256 == 0:
            tn //= 2
            gn = 2

    a_p = jnp.pad(a.astype(jnp.bfloat16), ((0, Mp - M), (0, Kp - K)))
    b_p = jnp.pad(b.astype(jnp.bfloat16), ((0, Kp - K), (0, Np - N)))
    c_p = jnp.pad(bias.astype(jnp.float32).reshape(1, N),
                  ((0, 0), (0, Np - N)))

    in_specs = [
        pl.BlockSpec((tm, tk), lambda i, j, k: (i, k)),
        pl.BlockSpec((tk, tn), lambda i, j, k: (k, j)),
        pl.BlockSpec((1, tn), lambda i, j, k: (0, j)),
    ]
    operands = [a_p, b_p, c_p]
    has_res = residual is not None
    if has_res:
        # Residual travels as bf16; it is upcast to f32 inside the epilogue.
        r_p = jnp.pad(residual.astype(jnp.bfloat16),
                      ((0, Mp - M), (0, Np - N)))
        in_specs.append(pl.BlockSpec((tm, tn), lambda i, j, k: (i, j)))
        operands.append(r_p)

    scratch = [pltpu.VMEM((tm, tn), jnp.float32)] if nk > 1 else []

    out = pl.pallas_call(
        functools.partial(_gemm_kernel, relu=relu, has_res=has_res, nk=nk),
        out_shape=jax.ShapeDtypeStruct((Mp, Np), jnp.bfloat16),
        grid_spec=pltpu.PrefetchScalarGridSpec(
            num_scalar_prefetch=0,
            grid=(gm, gn, nk),
            in_specs=in_specs,
            out_specs=pl.BlockSpec((tm, tn), lambda i, j, k: (i, j)),
            scratch_shapes=scratch,
        ),
        compiler_params=pltpu.CompilerParams(
            dimension_semantics=("parallel", "parallel", "arbitrary"),
            vmem_limit_bytes=32 * 1024 * 1024),
    )(*operands)
    return out[:M, :N]


def _avgpool_kernel(a_ref, o_ref, *, inv_denom):
    @pl.when(pl.program_id(0) == 0)
    def _():
        o_ref[...] = jnp.zeros_like(o_ref)

    o_ref[...] += jnp.sum(a_ref[...].astype(jnp.float32),
                          axis=0, keepdims=True) * inv_denom


def global_avgpool(a, denom):
    """Mean over rows of (M, C) via a tiled reduction with a resident (1,Cp) acc."""
    M, C = a.shape
    Cp = _rup(C, 128)
    Mp = _rup(M, 16)
    tm = Mp if Mp <= 1024 else 512
    Mp = _rup(M, tm)
    a_p = jnp.pad(a.astype(jnp.bfloat16), ((0, Mp - M), (0, Cp - C)))
    out = pl.pallas_call(
        functools.partial(_avgpool_kernel, inv_denom=1.0 / float(denom)),
        out_shape=jax.ShapeDtypeStruct((1, Cp), jnp.float32),
        grid_spec=pltpu.PrefetchScalarGridSpec(
            num_scalar_prefetch=0,
            grid=(Mp // tm,),
            in_specs=[pl.BlockSpec((tm, Cp), lambda i: (i, 0))],
            out_specs=pl.BlockSpec((1, Cp), lambda i: (0, 0)),
        ),
        compiler_params=pltpu.CompilerParams(
            dimension_semantics=("arbitrary",)),
    )(a_p)
    return out[:, :C]


# ----------------------------------------------------------------------------
# Conv3d (bf16 im2col glue) + folded BN + optional residual + ReLU
# ----------------------------------------------------------------------------
def conv3d_bn(x, w, scale, bias, *, stride, padding, relu, residual=None):
    """x: (N,T,H,W,Cin), w: (kt,kh,kw,Cin,Cout). PyTorch-style floor conv.

    `residual`, if given, is (N,To,Ho,Wo,Cout) and is added (then ReLU'd)
    inside the matmul epilogue.  BN scale is folded into the weight columns.
    """
    N, T, H, W, Cin = x.shape
    kt, kh, kw, _, Cout = w.shape
    st, sh, sw = stride
    pt, ph, pw = padding
    xp = jnp.pad(x.astype(jnp.bfloat16),
                 ((0, 0), (pt, pt), (ph, ph), (pw, pw), (0, 0)))
    To = (T + 2 * pt - kt) // st + 1
    Ho = (H + 2 * ph - kh) // sh + 1
    Wo = (W + 2 * pw - kw) // sw + 1
    patches = []
    for dt in range(kt):
        for dh in range(kh):
            for dw in range(kw):
                sl = xp[:,
                        dt:dt + (To - 1) * st + 1:st,
                        dh:dh + (Ho - 1) * sh + 1:sh,
                        dw:dw + (Wo - 1) * sw + 1:sw, :]
                patches.append(sl)
    a = jnp.concatenate(patches, axis=-1).reshape(
        N * To * Ho * Wo, kt * kh * kw * Cin)
    # Fold the eval-mode BN scale into the weight columns (f32, then bf16 cast
    # inside matmul_bias_act).  Epilogue only applies +bias (+res) (+ReLU).
    wmat = (w.astype(jnp.float32).reshape(kt * kh * kw * Cin, Cout)
            * scale.astype(jnp.float32)[None, :])
    res2d = None if residual is None else residual.reshape(-1, Cout)
    out = matmul_bias_act(a, wmat, bias, relu=relu, residual=res2d)
    return out.reshape(N, To, Ho, Wo, Cout)


# ----------------------------------------------------------------------------
# Deterministic parameter construction (r2plus1d_18 architecture)
# ----------------------------------------------------------------------------
def _conv_w(key, kt, kh, kw, cin, cout):
    fan_in = kt * kh * kw * cin
    return jax.random.normal(key, (kt, kh, kw, cin, cout),
                             jnp.float32) * math.sqrt(2.0 / fan_in)


def _bn_params(key, c, eps=1e-5):
    k1, k2, k3, k4 = jax.random.split(key, 4)
    gamma = 1.0 + 0.1 * jax.random.normal(k1, (c,), jnp.float32)
    beta = 0.05 * jax.random.normal(k2, (c,), jnp.float32)
    mean = 0.05 * jax.random.normal(k3, (c,), jnp.float32)
    var = jax.random.uniform(k4, (c,), jnp.float32, 0.5, 1.5)
    scale = gamma / jnp.sqrt(var + eps)
    bias = beta - mean * scale
    return scale, bias


def _midplanes(cin, cout):
    return (cin * cout * 3 * 3 * 3) // (cin * 3 * 3 + 3 * cout)


# (inplanes, planes, stride) for the 8 BasicBlocks of r2plus1d_18
_BLOCK_CFG = [(64, 64, 1), (64, 64, 1),
              (64, 128, 2), (128, 128, 1),
              (128, 256, 2), (256, 256, 1),
              (256, 512, 2), (512, 512, 1)]


def init_params(key):
    keys = iter(jax.random.split(key, 128))
    p = {}
    # R2Plus1dStem: (1,7,7) 3->45 s(1,2,2) p(0,3,3) +BN+ReLU ; (3,1,1) 45->64 +BN+ReLU
    p['stem'] = dict(
        ws=_conv_w(next(keys), 1, 7, 7, 3, 45), bns=_bn_params(next(keys), 45),
        wt=_conv_w(next(keys), 3, 1, 1, 45, 64), bnt=_bn_params(next(keys), 64))
    blocks = []
    for (cin, cout, s) in _BLOCK_CFG:
        mid1 = _midplanes(cin, cout)    # Conv2Plus1D(in=cin, out=cout)
        mid2 = _midplanes(cout, cout)   # Conv2Plus1D(in=cout, out=cout)
        blk = dict(
            stride=s,
            c1_s=_conv_w(next(keys), 1, 3, 3, cin, mid1),
            c1_s_bn=_bn_params(next(keys), mid1),
            c1_t=_conv_w(next(keys), 3, 1, 1, mid1, cout),
            c1_bn=_bn_params(next(keys), cout),
            c2_s=_conv_w(next(keys), 1, 3, 3, cout, mid2),
            c2_s_bn=_bn_params(next(keys), mid2),
            c2_t=_conv_w(next(keys), 3, 1, 1, mid2, cout),
            c2_bn=_bn_params(next(keys), cout))
        if s != 1 or cin != cout:
            blk['ds_w'] = _conv_w(next(keys), 1, 1, 1, cin, cout)
            blk['ds_bn'] = _bn_params(next(keys), cout)
        blocks.append(blk)
    p['blocks'] = blocks
    return p


# ----------------------------------------------------------------------------
# Forward pass (eval mode)
# ----------------------------------------------------------------------------
def _basic_block(x, blk):
    s = blk['stride']
    # conv1 = Conv2Plus1D(spatial +BN+ReLU, temporal) + BN + ReLU
    out = conv3d_bn(x, blk['c1_s'], *blk['c1_s_bn'],
                    stride=(1, s, s), padding=(0, 1, 1), relu=True)
    out = conv3d_bn(out, blk['c1_t'], *blk['c1_bn'],
                    stride=(s, 1, 1), padding=(1, 0, 0), relu=True)
    # conv2 = Conv2Plus1D(spatial +BN+ReLU, temporal) + BN; residual add + ReLU
    # are fused into the epilogue of the final temporal-conv matmul.
    out = conv3d_bn(out, blk['c2_s'], *blk['c2_s_bn'],
                    stride=(1, 1, 1), padding=(0, 1, 1), relu=True)
    if 'ds_w' in blk:
        res = conv3d_bn(x, blk['ds_w'], *blk['ds_bn'],
                        stride=(s, s, s), padding=(0, 0, 0), relu=False)
    else:
        res = x
    out = conv3d_bn(out, blk['c2_t'], *blk['c2_bn'],
                    stride=(1, 1, 1), padding=(1, 0, 0), relu=True,
                    residual=res)
    return out


def r2plus1d_18_feature(frames, params):
    """frames: (T, C, H, W) float32, mimicking the PyTorch module input.
    Returns (1, 512) features (avgpool output, squeezed)."""
    # unsqueeze(0) + permute([0,2,1,3,4]) -> (1, C, T, H, W); we go channels-last.
    x = jnp.transpose(frames, (0, 2, 3, 1))[None]  # (1, T, H, W, C)

    st = params['stem']
    x = conv3d_bn(x, st['ws'], *st['bns'],
                  stride=(1, 2, 2), padding=(0, 3, 3), relu=True)
    x = conv3d_bn(x, st['wt'], *st['bnt'],
                  stride=(1, 1, 1), padding=(1, 0, 0), relu=True)

    for blk in params['blocks']:
        x = _basic_block(x, blk)

    N, T, H, W, C = x.shape
    assert N == 1
    feat = global_avgpool(x.reshape(N * T * H * W, C), denom=T * H * W)
    return feat  # (1, 512) float32


# ----------------------------------------------------------------------------
if __name__ == "__main__":
    key = jax.random.PRNGKey(0)
    kp, kx = jax.random.split(key)
    params = init_params(kp)

    # Small clip: 8 frames of 3x16x16 (r2plus1d_18 stem requires 3 channels).
    T, C, H, W = 8, 3, 16, 16
    x = jax.random.normal(kx, (T, C, H, W), jnp.float32)

    feat = r2plus1d_18_feature(x, params)
    feat = jax.block_until_ready(feat)
    assert feat.shape == (1, 512), feat.shape
    assert bool(jnp.all(jnp.isfinite(feat)))
    print("KERNEL_OK")
</pallas_src>

<mosaic_0001>
module attributes {stable_mosaic.version = 11 : i64} {
  func.func @_gemm_kernel(%arg0: i32, %arg1: i32, %arg2: i32, %arg3: memref<256x256xbf16, #tpu.memory_space<vmem>>, %arg4: memref<256x128xbf16, #tpu.memory_space<vmem>>, %arg5: memref<1x128xf32, #tpu.memory_space<vmem>>, %arg6: memref<256x128xbf16, #tpu.memory_space<vmem>>) attributes {dimension_semantics = [#tpu.dimension_semantics<parallel>, #tpu.dimension_semantics<parallel>, #tpu.dimension_semantics<arbitrary>], iteration_bounds = array<i64: 2, 1, 1>, scalar_prefetch = 0 : i64, scratch_operands = 0 : i64, tpu.core_type = #tpu.core_type<tc>, window_params = [{transform_indices = @transform_0, window_bounds = array<i64: 256, 256>}, {transform_indices = @transform_1, window_bounds = array<i64: 256, 128>}, {transform_indices = @transform_2, window_bounds = array<i64: 1, 128>}, {transform_indices = @transform_3, window_bounds = array<i64: 256, 128>}]} {
    %c0 = arith.constant 0 : index
    %c0_0 = arith.constant 0 : index
    %0 = vector.load %arg3[%c0, %c0_0] : memref<256x256xbf16, #tpu.memory_space<vmem>>, vector<256x256xbf16>
    %c0_1 = arith.constant 0 : index
    %c0_2 = arith.constant 0 : index
    %1 = vector.load %arg4[%c0_1, %c0_2] : memref<256x128xbf16, #tpu.memory_space<vmem>>, vector<256x128xbf16>
    %cst = arith.constant dense<0.000000e+00> : vector<256x128xf32>
    %2 = tpu.matmul %0, %1, %cst {dimension_numbers = #tpu.dot_dimension_numbers<[1], [0], [0], [1], [0, 0, 1, 1], [], []>} : vector<256x256xbf16>, vector<256x128xbf16>, vector<256x128xf32> -> vector<256x128xf32>
    %c0_3 = arith.constant 0 : index
    %c0_4 = arith.constant 0 : index
    %3 = vector.load %arg5[%c0_3, %c0_4] : memref<1x128xf32, #tpu.memory_space<vmem>>, vector<1x128xf32>
    %4 = vector.broadcast %3 : vector<1x128xf32> to vector<256x128xf32>
    %5 = arith.addf %2, %4 : vector<256x128xf32>
    %cst_5 = arith.constant 0.000000e+00 : f32
    %6 = vector.broadcast %cst_5 : f32 to vector<256x128xf32>
    %7 = arith.maximumf %5, %6 : vector<256x128xf32>
    %8 = arith.truncf %7 : vector<256x128xf32> to vector<256x128xbf16>
    %c0_6 = arith.constant 0 : index
    %c0_7 = arith.constant 0 : index
    %9 = vector.load %arg6[%c0_6, %c0_7] : memref<256x128xbf16, #tpu.memory_space<vmem>>, vector<256x128xbf16>
    tpu.vector_store %arg6[%c0_6, %c0_7], %8 {strides = array<i32>} : memref<256x128xbf16, #tpu.memory_space<vmem>>, vector<256x128xbf16>,
    return
  }
  func.func @transform_0(%arg0: i32, %arg1: i32, %arg2: i32) -> (i32, i32) {
    %c0_i32 = arith.constant 0 : i32
    return %arg0, %arg2 : i32, i32
  }
  func.func @transform_1(%arg0: i32, %arg1: i32, %arg2: i32) -> (i32, i32) {
    %c0_i32 = arith.constant 0 : i32
    return %arg2, %arg1 : i32, i32
  }
  func.func @transform_2(%arg0: i32, %arg1: i32, %arg2: i32) -> (i32, i32) {
    %c0_i32 = arith.constant 0 : i32
    %c0_i32_0 = arith.constant 0 : i32
    return %c0_i32, %arg1 : i32, i32
  }
  func.func @transform_3(%arg0: i32, %arg1: i32, %arg2: i32) -> (i32, i32) {
    %c0_i32 = arith.constant 0 : i32
    return %arg0, %arg1 : i32, i32
  }
}

</mosaic_0001>

<llo_original>
// kernel: tpu_custom_call.1
$region0: #{tpu_custom_call.1}
  #allocation0 [shape = 'u32[]', space=smem, size = 0x4, offset = 0x4, fixed_abs, tag = 'smem constant byte address 0x4 - core index']
  #allocation1 [shape = 'u32[72,128]{1,0:T(1,128)}', space=vmem, size = 0x9000, scoped, tag = 'internal scratch']
  %s0 = inlined_call_operand.hbm [shape: bf16[512,256], index: 0, kind: input, shape index: {}]
  %s1 = inlined_call_operand.hbm [shape: bf16[256,128], index: 1, kind: input, shape index: {}]
  %s2 = inlined_call_operand.vmem [shape: f32[1,128], index: 2, kind: input, shape index: {}]
  %s3 = inlined_call_operand.hbm [shape: bf16[512,128], index: 3, kind: output, shape index: {}]
  %s4 = sld [smem:[#allocation0]]
  $region53: #{tpu_custom_call.1} parent=0
    _
  %s6 = ssub.s32 1, %s4
  %s7 = scalar_select 0, %s6, %s4
  $region1: #{tpu_custom_call.1} parent=0
    #allocation2 [shape = 'u8[262144]{0}', space=vmem, size = 0x40000, scoped, tag = 'input window, operand 0']
    #allocation3 [shape = 's32[2]{0}', space=sflag, size = 0x8, scoped, tag = 'scoped memory for tpu_custom_call.1']
    #allocation4 [shape = 's32[2]{0}', space=sflag, size = 0x8, scoped, tag = 'scoped memory for tpu_custom_call.1']
    #allocation5 [shape = 'u8[65536]{0}', space=vmem, size = 0x10000, scoped, tag = 'input window, operand 1, single buffered']
    #allocation6 [shape = 's32[1]{0}', space=sflag, size = 0x4, scoped, tag = 'scoped memory for tpu_custom_call.1']
    #allocation7 [shape = 'u8[131072]{0}', space=vmem, size = 0x20000, scoped, tag = 'output window, operand 0']
    %8 = vsyncpa [#allocation3], 0
    %s9 = scalar_lea.sflag [#allocation3], 1
    %10 = vsyncpa %s9, 0
    %11 = vsyncpa [#allocation6], 0
    %12 = vsyncpa [#allocation4], 0
    %s13 = scalar_lea.sflag [#allocation4], 1
    %14 = vsyncpa %s13, 0
    loop: start=0, step=1, limit=4
    $region2: #{tpu_custom_call.1} parent=1 // loop_pre_header
      _
    $region3: #{tpu_custom_call.1} parent=1 // loop_header
      %s16 = sphi 0, %s20
      %p17 = scmp.ge.s32.totalorder %s16, 4
      %s23 = sphi 0, %s42
      %s24 = sphi 0, %s38
      %s25 = sphi 0, %s34
      %s26 = sphi 0, %s23
      %s27 = sphi 0, %s24
      %s28 = sphi 0, %s25
      %s29 = sphi 0, %s26
      %s30 = sphi 0, %s27
      %s31 = sphi 0, %s28
      %s47 = sphi 0, %s49
      %s50 = sphi 0, %s47
      %s51 = sphi 0, %s50
      %s67 = sphi 0, %s51
      %s75 = sphi 0, %s77
      %s78 = sphi 0, %s75
      %s79 = sphi 0, %s78
      %s95 = sphi 0, %s79
      %s101 = sphi 0, %s103
      %s104 = sphi 0, %s101
      %s105 = sphi 0, %s104
      %s121 = sphi 0, %s105
      %s129 = sphi 0, %s131
      %s132 = sphi 0, %s129
      %s133 = sphi 0, %s132
      %s149 = sphi 0, %s133
    $region4: #{tpu_custom_call.1} parent=1 // loop_header_branch
      %19 = sbr.rel (%p17) target = $region8
    $region5: #{tpu_custom_call.1} parent=1 // loop_body
      %s21 = ssub.s32 %s16, 1
      %s22 = ssub.s32 %s16, 2
      %s32 = sadd.s32 1, %s25
      %p33 = scmp.ge.s32.totalorder %s32, 1
      %s34 = scalar_select %p33, 0, %s32
      %s35 = sadd.s32 1, %s24
      %s36 = scalar_select %p33, %s35, %s24
      %p37 = scmp.ge.s32.totalorder %s36, 1
      %s38 = scalar_select %p37, 0, %s36
      %s39 = sadd.s32 1, %s23
      %s40 = scalar_select %p37, %s39, %s23
      %p41 = scmp.ge.s32.totalorder %s40, 2
      %s42 = scalar_select %p41, 0, %s40
      %s43 = ssub.s32 %s23, %s42
      %s44 = ssub.s32 %s25, %s34
      %s45 = sor.u32 %s43, %s44
      %p46 = scmp.eq.s32.totalorder %s45, 0
      %s48 = sadd.s32 %s47, 1
      %s49 = scalar_select %p46, %s47, %s48
      %p52 = pneg %p46
      %p53 = scmp.eq.s32.totalorder %s16, 1
      %p54 = por %p52, %p53
      %p55 = scmp.ne.s32.totalorder %s47, %s50
      %p56 = scmp.eq.s32.totalorder %s16, 0
      %p57 = por %p55, %p56
      %p58 = scmp.ne.s32.totalorder %s47, %s50
      %p59 = scmp.eq.s32.totalorder %s21, 1
      %p60 = por %p58, %p59
      %p61 = scmp.ne.s32.totalorder %s50, %s51
      %p62 = scmp.eq.s32.totalorder %s21, 0
      %p63 = por %p61, %p62
      %p64 = scmp.ne.s32.totalorder %s50, %s51
      %p65 = scmp.eq.s32.totalorder %s22, 1
      %p66 = por %p64, %p65
      %p68 = scmp.ne.s32.totalorder %s51, %s67
      %p69 = scmp.eq.s32.totalorder %s22, 0
      %p70 = por %p68, %p69
      %s71 = ssub.s32 %s25, %s34
      %s72 = ssub.s32 %s24, %s38
      %s73 = sor.u32 %s71, %s72
      %p74 = scmp.eq.s32.totalorder %s73, 0
      %s76 = sadd.s32 %s75, 1
      %s77 = scalar_select %p74, %s75, %s76
      %p80 = pneg %p74
      %p81 = scmp.eq.s32.totalorder %s16, 1
      %p82 = por %p80, %p81
      %p83 = scmp.ne.s32.totalorder %s75, %s78
      %p84 = scmp.eq.s32.totalorder %s16, 0
      %p85 = por %p83, %p84
      %p86 = scmp.ne.s32.totalorder %s75, %s78
      %p87 = scmp.eq.s32.totalorder %s21, 1
      %p88 = por %p86, %p87
      %p89 = scmp.ne.s32.totalorder %s78, %s79
      %p90 = scmp.eq.s32.totalorder %s21, 0
      %p91 = por %p89, %p90
      %p92 = scmp.ne.s32.totalorder %s78, %s79
      %p93 = scmp.eq.s32.totalorder %s22, 1
      %p94 = por %p92, %p93
      %p96 = scmp.ne.s32.totalorder %s79, %s95
      %p97 = scmp.eq.s32.totalorder %s22, 0
      %p98 = por %p96, %p97
      %s99 = ssub.s32 %s24, %s38
      %p100 = scmp.eq.s32.totalorder %s99, 0
      %s102 = sadd.s32 %s101, 1
      %s103 = scalar_select %p100, %s101, %s102
      %p106 = pneg %p100
      %p107 = scmp.eq.s32.totalorder %s16, 1
      %p108 = por %p106, %p107
      %p109 = scmp.ne.s32.totalorder %s101, %s104
      %p110 = scmp.eq.s32.totalorder %s16, 0
      %p111 = por %p109, %p110
      %p112 = scmp.ne.s32.totalorder %s101, %s104
      %p113 = scmp.eq.s32.totalorder %s21, 1
      %p114 = por %p112, %p113
      %p115 = scmp.ne.s32.totalorder %s104, %s105
      %p116 = scmp.eq.s32.totalorder %s21, 0
      %p117 = por %p115, %p116
      %p118 = scmp.ne.s32.totalorder %s104, %s105
      %p119 = scmp.eq.s32.totalorder %s22, 1
      %p120 = por %p118, %p119
      %p122 = scmp.ne.s32.totalorder %s105, %s121
      %p123 = scmp.eq.s32.totalorder %s22, 0
      %p124 = por %p122, %p123
      %s125 = ssub.s32 %s23, %s42
      %s126 = ssub.s32 %s24, %s38
      %s127 = sor.u32 %s125, %s126
      %p128 = scmp.eq.s32.totalorder %s127, 0
      %s130 = sadd.s32 %s129, 1
      %s131 = scalar_select %p128, %s129, %s130
      %p134 = pneg %p128
      %p135 = scmp.eq.s32.totalorder %s16, 1
      %p136 = por %p134, %p135
      %p137 = scmp.ne.s32.totalorder %s129, %s132
      %p138 = scmp.eq.s32.totalorder %s16, 0
      %p139 = por %p137, %p138
      %p140 = scmp.ne.s32.totalorder %s129, %s132
      %p141 = scmp.eq.s32.totalorder %s21, 1
      %p142 = por %p140, %p141
      %p143 = scmp.ne.s32.totalorder %s132, %s133
      %p144 = scmp.eq.s32.totalorder %s21, 0
      %p145 = por %p143, %p144
      %p146 = scmp.ne.s32.totalorder %s132, %s133
      %p147 = scmp.eq.s32.totalorder %s22, 1
      %p148 = por %p146, %p147
      %p150 = scmp.ne.s32.totalorder %s133, %s149
      %p151 = scmp.eq.s32.totalorder %s22, 0
      %p152 = por %p150, %p151
      %p153 = scmp.le.s32.totalorder 1, %s16
      %p154 = scmp.lt.s32.totalorder %s16, 3
      %p155 = pnand %p153, %p154
      %p156 = pneg %p155
      // Predicated region
      $region9: #{tpu_custom_call.1} parent=5 // pred_check
        _
      $region10: #{tpu_custom_call.1} parent=5 // pred_check_branch
        %158 = sbr.rel (%p155) target = $region12
      $region11: #{tpu_custom_call.1} parent=5 // pred_region
        %s159 = ssub.s32 %s16, 1
        // Predicated region
        $region13: #{tpu_custom_call.1} parent=11 // pred_check
          %p160 = pneg %p91
        $region14: #{tpu_custom_call.1} parent=11 // pred_check_branch
          %162 = sbr.rel (%p160) target = $region16
        $region15: #{tpu_custom_call.1} parent=11 // pred_region
          %s163 = smul.u32 32, %s28
          %165 = vsyncadd [#allocation6], 0
          %s166 = sadd.s32 %s27, %s163
          %s167 = smul.addr %s166, 4
          %s168 = scalar_lea.hbm %s1, %s167
          %s169 = sshll.u32 %s168, 4
          %s170 = int_to_ptr.hbm [resolvable:$true] %s169
          %s171 = sshll.u32 [#allocation5], 4
          %s172 = int_to_ptr.vmem [resolvable:$true] %s171
          %177 = dma.hbm_to_vmem [thread:$0]  %s170, 2048, %s172, [#allocation6], 64, 64, 4
        $region16: #{tpu_custom_call.1} parent=11 // pred_fallthru
          _
        // Predicated region
        $region17: #{tpu_custom_call.1} parent=11 // pred_check
          %p178 = pneg %p117
        $region18: #{tpu_custom_call.1} parent=11 // pred_check_branch
          %180 = sbr.rel (%p178) target = $region20
        $region19: #{tpu_custom_call.1} parent=11 // pred_region
          %p181 = scmp.lt.s32.totalorder %s27, 0
          %s182 = scalar_select %p181, %s27, 0
          %s183 = scalar_lea.vmem %s2, %s182
        $region20: #{tpu_custom_call.1} parent=11 // pred_fallthru
          _
      $region12: #{tpu_custom_call.1} parent=5 // pred_fallthru
        _
      %p184 = scmp.lt.s32.totalorder %s16, 2
      // Predicated region
      $region21: #{tpu_custom_call.1} parent=5 // pred_check
        %p185 = pneg %p184
      $region22: #{tpu_custom_call.1} parent=5 // pred_check_branch
        %187 = sbr.rel (%p185) target = $region24
      $region23: #{tpu_custom_call.1} parent=5 // pred_region
        // Predicated region
        $region25: #{tpu_custom_call.1} parent=23 // pred_check
          %p188 = pneg %p57
        $region26: #{tpu_custom_call.1} parent=23 // pred_check_branch
          %190 = sbr.rel (%p188) target = $region28
        $region27: #{tpu_custom_call.1} parent=23 // pred_region
          %s191 = sand.u32 %s47, 1
          %s192 = scalar_lea.sflag [#allocation3], %s191
          %s193 = sand.u32 %s47, 1
          %s194 = smul.addr %s193, 256
          %s195 = scalar_lea.vmem [#allocation2], %s194
          %s196 = smul.u32 32, %s23
          %s197 = smul.u32 2, %s25
          %199 = vsyncadd %s192, 0
          %s200 = smul.addr %s196, 2
          %s201 = sadd.s32 %s197, %s200
          %s202 = smul.addr %s201, 4
          %s203 = scalar_lea.hbm %s0, %s202
          %s204 = sshll.u32 %s203, 4
          %s205 = int_to_ptr.hbm [resolvable:$true] %s204
          %s206 = sshll.u32 %s195, 4
          %s207 = int_to_ptr.vmem [resolvable:$true] %s206
          %212 = dma.hbm_to_vmem [thread:$0]  %s205, 4096, %s207, %s192, 128, 128, 8
        $region28: #{tpu_custom_call.1} parent=23 // pred_fallthru
          _
      $region24: #{tpu_custom_call.1} parent=5 // pred_fallthru
        _
      %p213 = scmp.le.s32.totalorder 1, %s16
      %p214 = scmp.lt.s32.totalorder %s16, 3
      %p215 = pnand %p213, %p214
      %p216 = pneg %p215
      // Predicated region
      $region29: #{tpu_custom_call.1} parent=5 // pred_check
        _
      $region30: #{tpu_custom_call.1} parent=5 // pred_check_branch
        %218 = sbr.rel (%p215) target = $region32
      $region31: #{tpu_custom_call.1} parent=5 // pred_region
        %s219 = ssub.s32 %s16, 1
        %s220 = sand.u32 %s50, 1
        %s221 = scalar_lea.sflag [#allocation3], %s220
        %s222 = sand.u32 %s50, 1
        %s223 = smul.addr %s222, 256
        %s224 = scalar_lea.vmem [#allocation2], %s223
        // Predicated region
        $region33: #{tpu_custom_call.1} parent=31 // pred_check
          %p225 = pneg %p63
        $region34: #{tpu_custom_call.1} parent=31 // pred_check_branch
          %227 = sbr.rel (%p225) target = $region36
        $region35: #{tpu_custom_call.1} parent=31 // pred_region
          %229 = dma.done %s221, 4096
        $region36: #{tpu_custom_call.1} parent=31 // pred_fallthru
          _
        // Predicated region
        $region37: #{tpu_custom_call.1} parent=31 // pred_check
          %p230 = pneg %p91
        $region38: #{tpu_custom_call.1} parent=31 // pred_check_branch
          %232 = sbr.rel (%p230) target = $region40
        $region39: #{tpu_custom_call.1} parent=31 // pred_region
          %234 = dma.done [#allocation6], 2048
        $region40: #{tpu_custom_call.1} parent=31 // pred_fallthru
          _
        %s235 = sand.u32 %s50, 1
        %s236 = scalar_lea.sflag [#allocation3], %s235
        %s237 = sand.u32 %s50, 1
        %s238 = smul.addr %s237, 256
        %s239 = scalar_lea.vmem [#allocation2], %s238
        %p240 = pneg %p63
        %p241 = pneg %p60
        %p242 = pneg %p91
        %p243 = pneg %p88
        %p244 = scmp.lt.s32.totalorder %s27, 0
        %s245 = scalar_select %p244, %s27, 0
        %s246 = scalar_lea.vmem %s2, %s245
        %p247 = pneg %p117
        %p248 = pneg %p114
        %p249 = pneg %p145
        %p250 = pneg %p142
        %s251 = sand.u32 %s132, 1
        %s252 = scalar_lea.sflag [#allocation4], %s251
        %s253 = sand.u32 %s132, 1
        %s254 = smul.addr %s253, 128
        %s255 = scalar_lea.vmem [#allocation7], %s254
        %s256 = smul.u32 32, %s26
        %s257 = smul.u32 2, %s28
        %s258 = smul.u32 32, %s28
        %p259 = scmp.lt.s32.totalorder %s27, 0
        %s260 = scalar_select %p259, %s27, 0
        %s261 = scalar_lea.vmem %s2, %s260
        %s262 = smul.u32 32, %s26
        %v263 = vld [vmem:[%s224] sm:$0xff]
        %v264 = vld [vmem:[%s224 + $0x8] sm:$0xff]
        %v265 = vld [vmem:[%s224 + $0x10] sm:$0xff]
        %v266 = vld [vmem:[%s224 + $0x18] sm:$0xff]
        %v267 = vld [vmem:[%s224 + $0x20] sm:$0xff]
        %v268 = vld [vmem:[%s224 + $0x28] sm:$0xff]
        %v269 = vld [vmem:[%s224 + $0x30] sm:$0xff]
        %v270 = vld [vmem:[%s224 + $0x38] sm:$0xff]
        %v271 = vld [vmem:[%s224 + $0x40] sm:$0xff]
        %v272 = vld [vmem:[%s224 + $0x48] sm:$0xff]
        %v273 = vld [vmem:[%s224 + $0x50] sm:$0xff]
        %v274 = vld [vmem:[%s224 + $0x58] sm:$0xff]
        %v275 = vld [vmem:[%s224 + $0x60] sm:$0xff]
        %v276 = vld [vmem:[%s224 + $0x68] sm:$0xff]
        %v277 = vld [vmem:[%s224 + $0x70] sm:$0xff]
        %v278 = vld [vmem:[%s224 + $0x78] sm:$0xff]
        %v279 = vld [vmem:[%s224 + $0x80] sm:$0xff]
        %v280 = vld [vmem:[%s224 + $0x88] sm:$0xff]
        %v281 = vld [vmem:[%s224 + $0x90] sm:$0xff]
        %v282 = vld [vmem:[%s224 + $0x98] sm:$0xff]
        %v283 = vld [vmem:[%s224 + $0xa0] sm:$0xff]
        %v284 = vld [vmem:[%s224 + $0xa8] sm:$0xff]
        %v285 = vld [vmem:[%s224 + $0xb0] sm:$0xff]
        %v286 = vld [vmem:[%s224 + $0xb8] sm:$0xff]
        %v287 = vld [vmem:[%s224 + $0xc0] sm:$0xff]
        %v288 = vld [vmem:[%s224 + $0xc8] sm:$0xff]
        %v289 = vld [vmem:[%s224 + $0xd0] sm:$0xff]
        %v290 = vld [vmem:[%s224 + $0xd8] sm:$0xff]
        %v291 = vld [vmem:[%s224 + $0xe0] sm:$0xff]
        %v292 = vld [vmem:[%s224 + $0xe8] sm:$0xff]
        %v293 = vld [vmem:[%s224 + $0xf0] sm:$0xff]
        %v294 = vld [vmem:[%s224 + $0xf8] sm:$0xff]
        %v295 = vld [vmem:[#allocation5] sm:$0xf]
        %v296 = vld [vmem:[#allocation5 + $0x4] sm:$0xf]
        %v297 = vld [vmem:[#allocation5 + $0x8] sm:$0xf]
        %v298 = vld [vmem:[#allocation5 + $0xc] sm:$0xf]
        %v299 = vld [vmem:[#allocation5 + $0x10] sm:$0xf]
        %v300 = vld [vmem:[#allocation5 + $0x14] sm:$0xf]
        %v301 = vld [vmem:[#allocation5 + $0x18] sm:$0xf]
        %v302 = vld [vmem:[#allocation5 + $0x1c] sm:$0xf]
        %v303 = vld [vmem:[#allocation5 + $0x20] sm:$0xf]
        %v304 = vld [vmem:[#allocation5 + $0x24] sm:$0xf]
        %v305 = vld [vmem:[#allocation5 + $0x28] sm:$0xf]
        %v306 = vld [vmem:[#allocation5 + $0x2c] sm:$0xf]
        %v307 = vld [vmem:[#allocation5 + $0x30] sm:$0xf]
        %v308 = vld [vmem:[#allocation5 + $0x34] sm:$0xf]
        %v309 = vld [vmem:[#allocation5 + $0x38] sm:$0xf]
        %v310 = vld [vmem:[#allocation5 + $0x3c] sm:$0xf]
        %v311 = vld [vmem:[#allocation5 + $0x40] sm:$0xf]
        %v312 = vld [vmem:[#allocation5 + $0x44] sm:$0xf]
        %v313 = vld [vmem:[#allocation5 + $0x48] sm:$0xf]
        %v314 = vld [vmem:[#allocation5 + $0x4c] sm:$0xf]
        %v315 = vld [vmem:[#allocation5 + $0x50] sm:$0xf]
        %v316 = vld [vmem:[#allocation5 + $0x54] sm:$0xf]
        %v317 = vld [vmem:[#allocation5 + $0x58] sm:$0xf]
        %v318 = vld [vmem:[#allocation5 + $0x5c] sm:$0xf]
        %v319 = vld [vmem:[#allocation5 + $0x60] sm:$0xf]
        %v320 = vld [vmem:[#allocation5 + $0x64] sm:$0xf]
        %v321 = vld [vmem:[#allocation5 + $0x68] sm:$0xf]
        %v322 = vld [vmem:[#allocation5 + $0x6c] sm:$0xf]
        %v323 = vld [vmem:[#allocation5 + $0x70] sm:$0xf]
        %v324 = vld [vmem:[#allocation5 + $0x74] sm:$0xf]
        %v325 = vld [vmem:[#allocation5 + $0x78] sm:$0xf]
        %v326 = vld [vmem:[#allocation5 + $0x7c] sm:$0xf]
        %v327 = vld [vmem:[%s261] sm:$0x1]
        %v329 = vperm.slane %v327, 0
        %v363 = vunpack.c.l.b16 %v263
        %v364 = vunpack.c.h.b16 %v263
        %v365 = vunpack.c.l.b16 %v264
        %v366 = vunpack.c.h.b16 %v264
        %v367 = vunpack.c.l.b16 %v265
        %v368 = vunpack.c.h.b16 %v265
        %v369 = vunpack.c.l.b16 %v266
        %v370 = vunpack.c.h.b16 %v266
        %v371 = vunpack.c.l.b16 %v267
        %v372 = vunpack.c.h.b16 %v267
        %v373 = vunpack.c.l.b16 %v268
        %v374 = vunpack.c.h.b16 %v268
        %v375 = vunpack.c.l.b16 %v269
        %v376 = vunpack.c.h.b16 %v269
        %v377 = vunpack.c.l.b16 %v270
        %v378 = vunpack.c.h.b16 %v270
        %v379 = vunpack.c.l.b16 %v271
        %v380 = vunpack.c.h.b16 %v271
        %v381 = vunpack.c.l.b16 %v272
        %v382 = vunpack.c.h.b16 %v272
        %v383 = vunpack.c.l.b16 %v273
        %v384 = vunpack.c.h.b16 %v273
        %v385 = vunpack.c.l.b16 %v274
        %v386 = vunpack.c.h.b16 %v274
        %v387 = vunpack.c.l.b16 %v275
        %v388 = vunpack.c.h.b16 %v275
        %v389 = vunpack.c.l.b16 %v276
        %v390 = vunpack.c.h.b16 %v276
        %v391 = vunpack.c.l.b16 %v277
        %v392 = vunpack.c.h.b16 %v277
        %v393 = vunpack.c.l.b16 %v278
        %v394 = vunpack.c.h.b16 %v278
        %v395 = vunpack.c.l.b16 %v279
        %v396 = vunpack.c.h.b16 %v279
        %v397 = vunpack.c.l.b16 %v280
        %v398 = vunpack.c.h.b16 %v280
        %v399 = vunpack.c.l.b16 %v281
        %v400 = vunpack.c.h.b16 %v281
        %v401 = vunpack.c.l.b16 %v282
        %v402 = vunpack.c.h.b16 %v282
        %v403 = vunpack.c.l.b16 %v283
        %v404 = vunpack.c.h.b16 %v283
        %v405 = vunpack.c.l.b16 %v284
        %v406 = vunpack.c.h.b16 %v284
        %v407 = vunpack.c.l.b16 %v285
        %v408 = vunpack.c.h.b16 %v285
        %v409 = vunpack.c.l.b16 %v286
        %v410 = vunpack.c.h.b16 %v286
        %v411 = vunpack.c.l.b16 %v287
        %v412 = vunpack.c.h.b16 %v287
        %v413 = vunpack.c.l.b16 %v288
        %v414 = vunpack.c.h.b16 %v288
        %v415 = vunpack.c.l.b16 %v289
        %v416 = vunpack.c.h.b16 %v289
        %v417 = vunpack.c.l.b16 %v290
        %v418 = vunpack.c.h.b16 %v290
        %v419 = vunpack.c.l.b16 %v291
        %v420 = vunpack.c.h.b16 %v291
        %v421 = vunpack.c.l.b16 %v292
        %v422 = vunpack.c.h.b16 %v292
        %v423 = vunpack.c.l.b16 %v293
        %v424 = vunpack.c.h.b16 %v293
        %v425 = vunpack.c.l.b16 %v294
        %v426 = vunpack.c.h.b16 %v294
        %v427 = vpack.c.b16 %v365, %v363
        %v428 = vpack.c.b16 %v366, %v364
        %v429 = vpack.c.b16 %v369, %v367
        %v430 = vpack.c.b16 %v370, %v368
        %v431 = vpack.c.b16 %v373, %v371
        %v432 = vpack.c.b16 %v374, %v372
        %v433 = vpack.c.b16 %v377, %v375
        %v434 = vpack.c.b16 %v378, %v376
        %v435 = vpack.c.b16 %v381, %v379
        %v436 = vpack.c.b16 %v382, %v380
        %v437 = vpack.c.b16 %v385, %v383
        %v438 = vpack.c.b16 %v386, %v384
        %v439 = vpack.c.b16 %v389, %v387
        %v440 = vpack.c.b16 %v390, %v388
        %v441 = vpack.c.b16 %v393, %v391
        %v442 = vpack.c.b16 %v394, %v392
        %v443 = vpack.c.b16 %v397, %v395
        %v444 = vpack.c.b16 %v398, %v396
        %v445 = vpack.c.b16 %v401, %v399
        %v446 = vpack.c.b16 %v402, %v400
        %v447 = vpack.c.b16 %v405, %v403
        %v448 = vpack.c.b16 %v406, %v404
        %v449 = vpack.c.b16 %v409, %v407
        %v450 = vpack.c.b16 %v410, %v408
        %v451 = vpack.c.b16 %v413, %v411
        %v452 = vpack.c.b16 %v414, %v412
        %v453 = vpack.c.b16 %v417, %v415
        %v454 = vpack.c.b16 %v418, %v416
        %v455 = vpack.c.b16 %v421, %v419
        %v456 = vpack.c.b16 %v422, %v420
        %v457 = vpack.c.b16 %v425, %v423
        %v458 = vpack.c.b16 %v426, %v424
        %v523 = vunpack.c.l.b16 %v295
        %v524 = vunpack.c.l.b16 %v296
        %v525 = vunpack.c.l.b16 %v297
        %v526 = vunpack.c.l.b16 %v298
        %v527 = vunpack.c.l.b16 %v299
        %v528 = vunpack.c.l.b16 %v300
        %v529 = vunpack.c.l.b16 %v301
        %v530 = vunpack.c.l.b16 %v302
        %v531 = vunpack.c.l.b16 %v303
        %v532 = vunpack.c.l.b16 %v304
        %v533 = vunpack.c.l.b16 %v305
        %v534 = vunpack.c.l.b16 %v306
        %v535 = vunpack.c.l.b16 %v307
        %v536 = vunpack.c.l.b16 %v308
        %v537 = vunpack.c.l.b16 %v309
        %v538 = vunpack.c.l.b16 %v310
        %v539 = vunpack.c.l.b16 %v311
        %v540 = vunpack.c.l.b16 %v312
        %v541 = vunpack.c.l.b16 %v313
        %v542 = vunpack.c.l.b16 %v314
        %v543 = vunpack.c.l.b16 %v315
        %v544 = vunpack.c.l.b16 %v316
        %v545 = vunpack.c.l.b16 %v317
        %v546 = vunpack.c.l.b16 %v318
        %v547 = vunpack.c.l.b16 %v319
        %v548 = vunpack.c.l.b16 %v320
        %v549 = vunpack.c.l.b16 %v321
        %v550 = vunpack.c.l.b16 %v322
        %v551 = vunpack.c.l.b16 %v323
        %v552 = vunpack.c.l.b16 %v324
        %v553 = vunpack.c.l.b16 %v325
        %v554 = vunpack.c.l.b16 %v326
        %v555 = vpack.c.b16 %v524, %v523
        %v556 = vpack.c.b16 %v526, %v525
        %v557 = vpack.c.b16 %v528, %v527
        %v558 = vpack.c.b16 %v530, %v529
        %v559 = vpack.c.b16 %v532, %v531
        %v560 = vpack.c.b16 %v534, %v533
        %v561 = vpack.c.b16 %v536, %v535
        %v562 = vpack.c.b16 %v538, %v537
        %v563 = vpack.c.b16 %v540, %v539
        %v564 = vpack.c.b16 %v542, %v541
        %v565 = vpack.c.b16 %v544, %v543
        %v566 = vpack.c.b16 %v546, %v545
        %v567 = vpack.c.b16 %v548, %v547
        %v568 = vpack.c.b16 %v550, %v549
        %v569 = vpack.c.b16 %v552, %v551
        %v570 = vpack.c.b16 %v554, %v553
        %587 = vmatpush.bf16.msra.mxu0 %v562
        %588 = vmatpush.bf16.msra.mxu0 %v561
        %589 = vmatpush.bf16.msra.mxu0 %v560
        %590 = vmatpush.bf16.msra.mxu0 %v559
        %591 = vmatpush.bf16.msra.mxu0 %v558
        %592 = vmatpush.bf16.msra.mxu0 %v557
        %593 = vmatpush.bf16.msra.mxu0 %v556
        %594 = vmatpush.bf16.msra.mxu0 %v555
        %595 = vmatmul.bf16.gmra.mxu0 %v427
        %v596 = vpop.f32.mrf.mxu0
        %v597 = vadd.f32 %v329, %v596
        %v598 = vpop.f32.mrf.mxu0
        %v599 = vadd.f32 %v329, %v598
        %600 = vmatmul.bf16.gmra.mxu0 %v429
        %v601 = vpop.f32.mrf.mxu0
        %v602 = vadd.f32 %v329, %v601
        %v603 = vpop.f32.mrf.mxu0
        %v604 = vadd.f32 %v329, %v603
        %605 = vmatmul.bf16.gmra.mxu0 %v431
        %v606 = vpop.f32.mrf.mxu0
        %v607 = vadd.f32 %v329, %v606
        %v608 = vpop.f32.mrf.mxu0
        %v609 = vadd.f32 %v329, %v608
        %610 = vmatmul.bf16.gmra.mxu0 %v433
        %v611 = vpop.f32.mrf.mxu0
        %v612 = vadd.f32 %v329, %v611
        %v613 = vpop.f32.mrf.mxu0
        %v614 = vadd.f32 %v329, %v613
        %615 = vmatmul.bf16.gmra.mxu0 %v435
        %v616 = vpop.f32.mrf.mxu0
        %v617 = vadd.f32 %v329, %v616
        %v618 = vpop.f32.mrf.mxu0
        %v619 = vadd.f32 %v329, %v618
        %620 = vmatmul.bf16.gmra.mxu0 %v437
        %v621 = vpop.f32.mrf.mxu0
        %v622 = vadd.f32 %v329, %v621
        %v623 = vpop.f32.mrf.mxu0
        %v624 = vadd.f32 %v329, %v623
        %625 = vmatmul.bf16.gmra.mxu0 %v439
        %v626 = vpop.f32.mrf.mxu0
        %v627 = vadd.f32 %v329, %v626
        %v628 = vpop.f32.mrf.mxu0
        %v629 = vadd.f32 %v329, %v628
        %630 = vmatmul.bf16.gmra.mxu0 %v441
        %v631 = vpop.f32.mrf.mxu0
        %v632 = vadd.f32 %v329, %v631
        %v633 = vpop.f32.mrf.mxu0
        %v634 = vadd.f32 %v329, %v633
        %635 = vmatmul.bf16.gmra.mxu0 %v443
        %v636 = vpop.f32.mrf.mxu0
        %v637 = vadd.f32 %v329, %v636
        %v638 = vpop.f32.mrf.mxu0
        %v639 = vadd.f32 %v329, %v638
        %640 = vmatmul.bf16.gmra.mxu0 %v445
        %v641 = vpop.f32.mrf.mxu0
        %v642 = vadd.f32 %v329, %v641
        %v643 = vpop.f32.mrf.mxu0
        %v644 = vadd.f32 %v329, %v643
        %645 = vmatmul.bf16.gmra.mxu0 %v447
        %v646 = vpop.f32.mrf.mxu0
        %v647 = vadd.f32 %v329, %v646
        %v648 = vpop.f32.mrf.mxu0
        %v649 = vadd.f32 %v329, %v648
        %650 = vmatmul.bf16.gmra.mxu0 %v449
        %v651 = vpop.f32.mrf.mxu0
        %v652 = vadd.f32 %v329, %v651
        %v653 = vpop.f32.mrf.mxu0
        %v654 = vadd.f32 %v329, %v653
        %655 = vmatmul.bf16.gmra.mxu0 %v451
        %v656 = vpop.f32.mrf.mxu0
        %v657 = vadd.f32 %v329, %v656
        %v658 = vpop.f32.mrf.mxu0
        %v659 = vadd.f32 %v329, %v658
        %660 = vmatmul.bf16.gmra.mxu0 %v453
        %v661 = vpop.f32.mrf.mxu0
        %v662 = vadd.f32 %v329, %v661
        %v663 = vpop.f32.mrf.mxu0
        %v664 = vadd.f32 %v329, %v663
        %665 = vmatmul.bf16.gmra.mxu0 %v455
        %v666 = vpop.f32.mrf.mxu0
        %v667 = vadd.f32 %v329, %v666
        %v668 = vpop.f32.mrf.mxu0
        %v669 = vadd.f32 %v329, %v668
        %670 = vmatmul.bf16.gmra.mxu0 %v457
        %v671 = vpop.f32.mrf.mxu0
        %v672 = vadd.f32 %v329, %v671
        %v673 = vpop.f32.mrf.mxu0
        %v674 = vadd.f32 %v329, %v673
        %675 = vdwg.mxu0
        %676 = vmatpush.bf16.msra.mxu0 %v570
        %677 = vmatpush.bf16.msra.mxu0 %v569
        %678 = vmatpush.bf16.msra.mxu0 %v568
        %679 = vmatpush.bf16.msra.mxu0 %v567
        %680 = vmatpush.bf16.msra.mxu0 %v566
        %681 = vmatpush.bf16.msra.mxu0 %v565
        %682 = vmatpush.bf16.msra.mxu0 %v564
        %683 = vmatpush.bf16.msra.mxu0 %v563
        %684 = vmatmul.bf16.gmra.mxu0 %v428
        %v685 = vpop.f32.mrf.mxu0
        %v686 = vadd.f32 %v597, %v685
        %v687 = vpop.f32.mrf.mxu0
        %v688 = vadd.f32 %v599, %v687
        %689 = vmatmul.bf16.gmra.mxu0 %v430
        %v690 = vpop.f32.mrf.mxu0
        %v691 = vadd.f32 %v602, %v690
        %v692 = vpop.f32.mrf.mxu0
        %v693 = vadd.f32 %v604, %v692
        %694 = vmatmul.bf16.gmra.mxu0 %v432
        %v695 = vpop.f32.mrf.mxu0
        %v696 = vadd.f32 %v607, %v695
        %v697 = vpop.f32.mrf.mxu0
        %v698 = vadd.f32 %v609, %v697
        %699 = vmatmul.bf16.gmra.mxu0 %v434
        %v700 = vpop.f32.mrf.mxu0
        %v701 = vadd.f32 %v612, %v700
        %v702 = vpop.f32.mrf.mxu0
        %v703 = vadd.f32 %v614, %v702
        %704 = vmatmul.bf16.gmra.mxu0 %v436
        %v705 = vpop.f32.mrf.mxu0
        %v706 = vadd.f32 %v617, %v705
        %v707 = vpop.f32.mrf.mxu0
        %v708 = vadd.f32 %v619, %v707
        %709 = vmatmul.bf16.gmra.mxu0 %v438
        %v710 = vpop.f32.mrf.mxu0
        %v711 = vadd.f32 %v622, %v710
        %v712 = vpop.f32.mrf.mxu0
        %v713 = vadd.f32 %v624, %v712
        %714 = vmatmul.bf16.gmra.mxu0 %v440
        %v715 = vpop.f32.mrf.mxu0
        %v716 = vadd.f32 %v627, %v715
        %v717 = vpop.f32.mrf.mxu0
        %v718 = vadd.f32 %v629, %v717
        %719 = vmatmul.bf16.gmra.mxu0 %v442
        %v720 = vpop.f32.mrf.mxu0
        %v721 = vadd.f32 %v632, %v720
        %v722 = vpop.f32.mrf.mxu0
        %v723 = vadd.f32 %v634, %v722
        %724 = vmatmul.bf16.gmra.mxu0 %v444
        %v725 = vpop.f32.mrf.mxu0
        %v726 = vadd.f32 %v637, %v725
        %v727 = vpop.f32.mrf.mxu0
        %v728 = vadd.f32 %v639, %v727
        %729 = vmatmul.bf16.gmra.mxu0 %v446
        %v730 = vpop.f32.mrf.mxu0
        %v731 = vadd.f32 %v642, %v730
        %v732 = vpop.f32.mrf.mxu0
        %v733 = vadd.f32 %v644, %v732
        %734 = vmatmul.bf16.gmra.mxu0 %v448
        %v735 = vpop.f32.mrf.mxu0
        %v736 = vadd.f32 %v647, %v735
        %v737 = vpop.f32.mrf.mxu0
        %v738 = vadd.f32 %v649, %v737
        %739 = vmatmul.bf16.gmra.mxu0 %v450
        %v740 = vpop.f32.mrf.mxu0
        %v741 = vadd.f32 %v652, %v740
        %v742 = vpop.f32.mrf.mxu0
        %v743 = vadd.f32 %v654, %v742
        %744 = vmatmul.bf16.gmra.mxu0 %v452
        %v745 = vpop.f32.mrf.mxu0
        %v746 = vadd.f32 %v657, %v745
        %v747 = vpop.f32.mrf.mxu0
        %v748 = vadd.f32 %v659, %v747
        %749 = vmatmul.bf16.gmra.mxu0 %v454
        %v750 = vpop.f32.mrf.mxu0
        %v751 = vadd.f32 %v662, %v750
        %v752 = vpop.f32.mrf.mxu0
        %v753 = vadd.f32 %v664, %v752
        %754 = vmatmul.bf16.gmra.mxu0 %v456
        %v755 = vpop.f32.mrf.mxu0
        %v756 = vadd.f32 %v667, %v755
        %v757 = vpop.f32.mrf.mxu0
        %v758 = vadd.f32 %v669, %v757
        %759 = vmatmul.bf16.gmra.mxu0 %v458
        %v760 = vpop.f32.mrf.mxu0
        %v761 = vadd.f32 %v672, %v760
        %v762 = vpop.f32.mrf.mxu0
        %v763 = vadd.f32 %v674, %v762
        %764 = vdwg.mxu0
        %v765 = vmax.f32 %v686, 0.0
        %v766 = vmax.f32 %v688, 0.0
        %v767 = vmax.f32 %v691, 0.0
        %v768 = vmax.f32 %v693, 0.0
        %v769 = vmax.f32 %v696, 0.0
        %v770 = vmax.f32 %v698, 0.0
        %v771 = vmax.f32 %v701, 0.0
        %v772 = vmax.f32 %v703, 0.0
        %v773 = vmax.f32 %v706, 0.0
        %v774 = vmax.f32 %v708, 0.0
        %v775 = vmax.f32 %v711, 0.0
        %v776 = vmax.f32 %v713, 0.0
        %v777 = vmax.f32 %v716, 0.0
        %v778 = vmax.f32 %v718, 0.0
        %v779 = vmax.f32 %v721, 0.0
        %v780 = vmax.f32 %v723, 0.0
        %v781 = vmax.f32 %v726, 0.0
        %v782 = vmax.f32 %v728, 0.0
        %v783 = vmax.f32 %v731, 0.0
        %v784 = vmax.f32 %v733, 0.0
        %v785 = vmax.f32 %v736, 0.0
        %v786 = vmax.f32 %v738, 0.0
        %v787 = vmax.f32 %v741, 0.0
        %v788 = vmax.f32 %v743, 0.0
        %v789 = vmax.f32 %v746, 0.0
        %v790 = vmax.f32 %v748, 0.0
        %v791 = vmax.f32 %v751, 0.0
        %v792 = vmax.f32 %v753, 0.0
        %v793 = vmax.f32 %v756, 0.0
        %v794 = vmax.f32 %v758, 0.0
        %v795 = vmax.f32 %v761, 0.0
        %v796 = vmax.f32 %v763, 0.0
        %v797 = vpack.c.bf16 %v765, %v765
        %v798 = vpack.c.bf16 %v766, %v766
        %v799 = vpack.c.bf16 %v767, %v767
        %v800 = vpack.c.bf16 %v768, %v768
        %v801 = vpack.c.bf16 %v769, %v769
        %v802 = vpack.c.bf16 %v770, %v770
        %v803 = vpack.c.bf16 %v771, %v771
        %v804 = vpack.c.bf16 %v772, %v772
        %v805 = vpack.c.bf16 %v773, %v773
        %v806 = vpack.c.bf16 %v774, %v774
        %v807 = vpack.c.bf16 %v775, %v775
        %v808 = vpack.c.bf16 %v776, %v776
        %v809 = vpack.c.bf16 %v777, %v777
        %v810 = vpack.c.bf16 %v778, %v778
        %v811 = vpack.c.bf16 %v779, %v779
        %v812 = vpack.c.bf16 %v780, %v780
        %v813 = vpack.c.bf16 %v781, %v781
        %v814 = vpack.c.bf16 %v782, %v782
        %v815 = vpack.c.bf16 %v783, %v783
        %v816 = vpack.c.bf16 %v784, %v784
        %v817 = vpack.c.bf16 %v785, %v785
        %v818 = vpack.c.bf16 %v786, %v786
        %v819 = vpack.c.bf16 %v787, %v787
        %v820 = vpack.c.bf16 %v788, %v788
        %v821 = vpack.c.bf16 %v789, %v789
        %v822 = vpack.c.bf16 %v790, %v790
        %v823 = vpack.c.bf16 %v791, %v791
        %v824 = vpack.c.bf16 %v792, %v792
        %v825 = vpack.c.bf16 %v793, %v793
        %v826 = vpack.c.bf16 %v794, %v794
        %v827 = vpack.c.bf16 %v795, %v795
        %v828 = vpack.c.bf16 %v796, %v796
        %829 = vst [vmem:[%s255] sm:$0xf] %v797
        %830 = vst [vmem:[%s255 + $0x4] sm:$0xf] %v798
        %831 = vst [vmem:[%s255 + $0x8] sm:$0xf] %v799
        %832 = vst [vmem:[%s255 + $0xc] sm:$0xf] %v800
        %833 = vst [vmem:[%s255 + $0x10] sm:$0xf] %v801
        %834 = vst [vmem:[%s255 + $0x14] sm:$0xf] %v802
        %835 = vst [vmem:[%s255 + $0x18] sm:$0xf] %v803
        %836 = vst [vmem:[%s255 + $0x1c] sm:$0xf] %v804
        %837 = vst [vmem:[%s255 + $0x20] sm:$0xf] %v805
        %838 = vst [vmem:[%s255 + $0x24] sm:$0xf] %v806
        %839 = vst [vmem:[%s255 + $0x28] sm:$0xf] %v807
        %840 = vst [vmem:[%s255 + $0x2c] sm:$0xf] %v808
        %841 = vst [vmem:[%s255 + $0x30] sm:$0xf] %v809
        %842 = vst [vmem:[%s255 + $0x34] sm:$0xf] %v810
        %843 = vst [vmem:[%s255 + $0x38] sm:$0xf] %v811
        %844 = vst [vmem:[%s255 + $0x3c] sm:$0xf] %v812
        %845 = vst [vmem:[%s255 + $0x40] sm:$0xf] %v813
        %846 = vst [vmem:[%s255 + $0x44] sm:$0xf] %v814
        %847 = vst [vmem:[%s255 + $0x48] sm:$0xf] %v815
        %848 = vst [vmem:[%s255 + $0x4c] sm:$0xf] %v816
        %849 = vst [vmem:[%s255 + $0x50] sm:$0xf] %v817
        %850 = vst [vmem:[%s255 + $0x54] sm:$0xf] %v818
        %851 = vst [vmem:[%s255 + $0x58] sm:$0xf] %v819
        %852 = vst [vmem:[%s255 + $0x5c] sm:$0xf] %v820
        %853 = vst [vmem:[%s255 + $0x60] sm:$0xf] %v821
        %854 = vst [vmem:[%s255 + $0x64] sm:$0xf] %v822
        %855 = vst [vmem:[%s255 + $0x68] sm:$0xf] %v823
        %856 = vst [vmem:[%s255 + $0x6c] sm:$0xf] %v824
        %857 = vst [vmem:[%s255 + $0x70] sm:$0xf] %v825
        %858 = vst [vmem:[%s255 + $0x74] sm:$0xf] %v826
        %859 = vst [vmem:[%s255 + $0x78] sm:$0xf] %v827
        %860 = vst [vmem:[%s255 + $0x7c] sm:$0xf] %v828
        %s861 = sand.u32 %s132, 1
        %s862 = scalar_lea.sflag [#allocation4], %s861
        %s863 = sand.u32 %s132, 1
        %s864 = smul.addr %s863, 128
        %s865 = scalar_lea.vmem [#allocation7], %s864
        // Predicated region
        $region41: #{tpu_custom_call.1} parent=31 // pred_check
          %p866 = pneg %p142
        $region42: #{tpu_custom_call.1} parent=31 // pred_check_branch
          %868 = sbr.rel (%p866) target = $region44
        $region43: #{tpu_custom_call.1} parent=31 // pred_region
          %s869 = smul.u32 32, %s26
          %871 = vsyncadd %s862, 0
          %s872 = sadd.s32 %s27, %s869
          %s873 = smul.addr %s872, 4
          %s874 = scalar_lea.hbm %s3, %s873
          %s875 = sshll.u32 %s865, 4
          %s876 = int_to_ptr.vmem [resolvable:$true] %s875
          %s877 = sshll.u32 %s874, 4
          %s878 = int_to_ptr.hbm [resolvable:$true] %s877
          %883 = dma.vmem_to_hbm [thread:$0]  %s876, 2048, %s878, %s862, 64, 64, 4
        $region44: #{tpu_custom_call.1} parent=31 // pred_fallthru
          _
      $region32: #{tpu_custom_call.1} parent=5 // pred_fallthru
        _
      %p884 = scmp.le.s32.totalorder 2, %s16
      // Predicated region
      $region45: #{tpu_custom_call.1} parent=5 // pred_check
        %p885 = pneg %p884
      $region46: #{tpu_custom_call.1} parent=5 // pred_check_branch
        %887 = sbr.rel (%p885) target = $region48
      $region47: #{tpu_custom_call.1} parent=5 // pred_region
        %s888 = ssub.s32 %s16, 2
        // Predicated region
        $region49: #{tpu_custom_call.1} parent=47 // pred_check
          %p889 = pneg %p148
        $region50: #{tpu_custom_call.1} parent=47 // pred_check_branch
          %891 = sbr.rel (%p889) target = $region52
        $region51: #{tpu_custom_call.1} parent=47 // pred_region
          %s892 = sand.u32 %s133, 1
          %s893 = scalar_lea.sflag [#allocation4], %s892
          %s894 = sand.u32 %s133, 1
          %s895 = smul.addr %s894, 128
          %s896 = scalar_lea.vmem [#allocation7], %s895
          %898 = dma.done %s893, 2048
        $region52: #{tpu_custom_call.1} parent=47 // pred_fallthru
          _
      $region48: #{tpu_custom_call.1} parent=5 // pred_fallthru
        _
    $region6: #{tpu_custom_call.1} parent=1 // loop_footer
      %s20 = sadd.s32 1, %s16
    $region7: #{tpu_custom_call.1} parent=1 // loop_footer_branch
      %15 = sbr.rel target = $region3
    $region8: #{tpu_custom_call.1} parent=1 // loop_exit
      _
    %899 = vsyncpa [#allocation3], 1
    %s900 = scalar_lea.sflag [#allocation3], 1
    %901 = vsyncpa %s900, 1
    %902 = vsyncpa [#allocation6], 1
    %903 = vsyncpa [#allocation4], 1
    %s904 = scalar_lea.sflag [#allocation4], 1
    %905 = vsyncpa %s904, 1

</llo_original>
